<compile_context>
chip_gen: v7x
topology: tpu7x:2x2x1
jax: 0.10.0
libtpu: 0.0.40
codegen_flags: <defaults>
</compile_context>

<pallas_src>
import jax
import jax.numpy as jnp
import numpy as np
from jax.experimental import pallas as pl
from jax.experimental.pallas import tpu as pltpu


def ntn_kernel_per_batch(q_ref, wp_ref, r_ref, o_ref):
    """One grid step = one batch element.  Body = 2 MXU matmuls + sigmoid."""
    s = jnp.dot(q_ref[0], wp_ref[...], preferred_element_type=jnp.float32)   # (Q, K*Dp)
    out = jnp.dot(s, r_ref[0], preferred_element_type=jnp.float32)           # (Q, K*A)
    o_ref[0] = jax.nn.sigmoid(out).astype(o_ref.dtype)


def ntn_kernel_fused_batch(q_ref, wp_ref, r_ref, o_ref):
    """Single grid step, all batches fused (single-TensorCore chips)."""
    b_tot = r_ref.shape[0]
    q_rows = o_ref.shape[1]
    # Stage 1 for every batch row at once: (B*Q, Dp) @ (Dp, K*Dp)
    s = jnp.dot(q_ref[...], wp_ref[...], preferred_element_type=jnp.float32)
    for bb in range(b_tot):  # static unroll, B is tiny (2)
        out_b = jnp.dot(s[bb * q_rows:(bb + 1) * q_rows, :], r_ref[bb],
                        preferred_element_type=jnp.float32)                  # (Q, K*A)
        o_ref[bb] = jax.nn.sigmoid(out_b).astype(o_ref.dtype)


def _single_tensorcore_chip() -> bool:
    """True for TPU generations with one TensorCore per chip (v5e / v6e)."""
    try:
        kind = jax.devices()[0].device_kind.lower()
    except Exception:
        return False
    return any(tag in kind for tag in ("v5e", "v5 lite", "v5litepod", "v6e", "v6 lite"))


def ntn_forward(batch_q_em, batch_da_em, w, V, b):
    B, Q, D = batch_q_em.shape
    _, A, _ = batch_da_em.shape
    K = w.shape[0]

    # Augmented/padded feature width.  D+1 = 33 -> 64 so that K*Dp = 256 exactly
    # fills the MXU contraction depth in stage 2 and all slab boundaries are
    # sublane/lane aligned.  Extra rows/cols are zero, so results are exact.
    Dp = 64
    assert D + 1 <= Dp, "Dp must cover D + 1 (affine augmentation column)"
    f32 = jnp.float32

    # --- wrapper-side packing (pure layout plumbing, fused by XLA) -----------
    q_aug = jnp.concatenate(
        [batch_q_em.astype(f32),
         jnp.ones((B, Q, 1), f32),
         jnp.zeros((B, Q, Dp - D - 1), f32)], axis=-1)                  # (B, Q, Dp)
    da_aug = jnp.concatenate(
        [batch_da_em.astype(f32),
         jnp.ones((B, A, 1), f32),
         jnp.zeros((B, A, Dp - D - 1), f32)], axis=-1)                  # (B, A, Dp)

    # Augmented tensor  W'[k] = [[W[k], Vq[k]^T], [Vd[k], bias[k]]]
    w_aug = jnp.zeros((K, Dp, Dp), f32)
    w_aug = w_aug.at[:, :D, :D].set(w.astype(f32))
    w_aug = w_aug.at[:, :D, D].set(V[:, :D].astype(f32))       # Vq as last column
    w_aug = w_aug.at[:, D, :D].set(V[:, D:].astype(f32))       # Vd as last row
    w_aug = w_aug.at[:, D, D].set(b.reshape(K).astype(f32))    # bias in the corner
    wp = jnp.transpose(w_aug, (1, 0, 2)).reshape(Dp, K * Dp)   # Wp[d, k*Dp+e] = W'[k,d,e]

    # Block-diagonal stage-2 RHS:  R[b, k*Dp+e, k*A+j] = da'[b, j, e]
    da_t = jnp.transpose(da_aug, (0, 2, 1))                    # (B, Dp, A)
    eye_k = jnp.eye(K, dtype=f32)
    r = jnp.einsum("kl,bej->bkelj", eye_k, da_t).reshape(B, K * Dp, K * A)

    cost = pl.CostEstimate(
        flops=2 * B * Q * Dp * (K * Dp) + 2 * B * Q * (K * Dp) * (K * A),
        transcendentals=B * Q * K * A,
        bytes_accessed=4 * (B * Q * Dp + Dp * K * Dp + B * K * Dp * K * A + B * Q * K * A),
    )

    if _single_tensorcore_chip():
        # v5e / v6e: one TensorCore -> collapse the grid to a single step.
        grid_spec = pltpu.PrefetchScalarGridSpec(
            num_scalar_prefetch=0,
            grid=(1,),
            in_specs=[
                pl.BlockSpec((B * Q, Dp), lambda i: (0, 0)),          # stacked q'
                pl.BlockSpec((Dp, K * Dp), lambda i: (0, 0)),         # packed W'
                pl.BlockSpec((B, K * Dp, K * A), lambda i: (0, 0, 0)),  # block-diag da'
            ],
            out_specs=pl.BlockSpec((B, Q, K * A), lambda i: (0, 0, 0)),
        )
        out_packed = pl.pallas_call(
            ntn_kernel_fused_batch,
            out_shape=jax.ShapeDtypeStruct((B, Q, K * A), f32),
            grid_spec=grid_spec,
            cost_estimate=cost,
            compiler_params=pltpu.CompilerParams(dimension_semantics=("arbitrary",)),
        )(q_aug.reshape(B * Q, Dp), wp, r)
    else:
        # Multi-TensorCore chips (v7x): one batch per core via the parallel grid.
        grid_spec = pltpu.PrefetchScalarGridSpec(
            num_scalar_prefetch=0,
            grid=(B,),
            in_specs=[
                pl.BlockSpec((1, Q, Dp), lambda bb: (bb, 0, 0)),        # q'  (per batch)
                pl.BlockSpec((Dp, K * Dp), lambda bb: (0, 0)),          # W'  (loaded once)
                pl.BlockSpec((1, K * Dp, K * A), lambda bb: (bb, 0, 0)),  # da' block-diag
            ],
            out_specs=pl.BlockSpec((1, Q, K * A), lambda bb: (bb, 0, 0)),
        )
        out_packed = pl.pallas_call(
            ntn_kernel_per_batch,
            out_shape=jax.ShapeDtypeStruct((B, Q, K * A), f32),
            grid_spec=grid_spec,
            cost_estimate=cost,
            compiler_params=pltpu.CompilerParams(dimension_semantics=("parallel",)),
        )(q_aug, wp, r)

    # (B, Q, K*A) -> (B, K, Q, A)  (tiny reshape/transpose handled by XLA)
    return out_packed.reshape(B, Q, K, A).transpose(0, 2, 1, 3)


def ntn_reference(batch_q_em, batch_da_em, w, V, b):
    """Pure-JAX reference mirroring the PyTorch forward semantics."""
    D = batch_q_em.shape[-1]
    first = jnp.einsum("bqd,kde,bae->bkqa", batch_q_em, w, batch_da_em)
    vq, vd = V[:, :D], V[:, D:]
    mid = (
        jnp.einsum("kd,bqd->bkq", vq, batch_q_em)[:, :, :, None]
        + jnp.einsum("kd,bad->bka", vd, batch_da_em)[:, :, None, :]
    )
    end = first + mid + b[None, :, :, :]
    return jax.nn.sigmoid(end)


if __name__ == "__main__":
    # Small shapes implied by the module: q_size=8, da_size=8, D=32, k=4, batch=2.
    B, Q, A, D, K = 2, 8, 8, 32, 4

    key = jax.random.PRNGKey(0)
    kq, kd, kw, kv, kb = jax.random.split(key, 5)

    batch_q_em = jax.random.normal(kq, (B, Q, D), dtype=jnp.float32)
    batch_da_em = jax.random.normal(kd, (B, A, D), dtype=jnp.float32)

    # Deterministic xavier-uniform-style parameter init (matches module shapes).
    w_bound = float(np.sqrt(6.0 / (D * D + K * D)))
    v_bound = float(np.sqrt(6.0 / (K + 2 * D)))
    b_bound = float(np.sqrt(6.0 / (K + 1)))
    w = jax.random.uniform(kw, (K, D, D), jnp.float32, -w_bound, w_bound)
    V = jax.random.uniform(kv, (K, 2 * D), jnp.float32, -v_bound, v_bound)
    b = jax.random.uniform(kb, (K, 1, 1), jnp.float32, -b_bound, b_bound)

    ntn_fwd = jax.jit(ntn_forward)
    out = jax.block_until_ready(ntn_fwd(batch_q_em, batch_da_em, w, V, b))
    ref = jax.block_until_ready(ntn_reference(batch_q_em, batch_da_em, w, V, b))

    assert out.shape == (B, K, Q, A), out.shape
    np.testing.assert_allclose(np.asarray(out), np.asarray(ref), rtol=1e-5, atol=1e-5)

    print("KERNEL_OK")
</pallas_src>

<mosaic_0001>
module attributes {stable_mosaic.version = 11 : i64} {
  func.func @ntn_kernel_per_batch(%arg0: i32, %arg1: memref<1x8x64xf32, #tpu.memory_space<vmem>>, %arg2: memref<64x256xf32, #tpu.memory_space<vmem>>, %arg3: memref<1x256x32xf32, #tpu.memory_space<vmem>>, %arg4: memref<1x8x32xf32, #tpu.memory_space<vmem>>) attributes {dimension_semantics = [#tpu.dimension_semantics<parallel>], iteration_bounds = array<i64: 2>, scalar_prefetch = 0 : i64, scratch_operands = 0 : i64, tpu.core_type = #tpu.core_type<tc>, window_params = [{transform_indices = @transform_0, window_bounds = array<i64: 1, 8, 64>}, {pipeline_mode = #tpu.pipeline_mode<synchronous>, transform_indices = @transform_1, window_bounds = array<i64: 64, 256>}, {transform_indices = @transform_2, window_bounds = array<i64: 1, 256, 32>}, {transform_indices = @transform_3, window_bounds = array<i64: 1, 8, 32>}]} {
    %c0 = arith.constant 0 : index
    %c0_0 = arith.constant 0 : index
    %c0_1 = arith.constant 0 : index
    %0 = vector.load %arg1[%c0, %c0_0, %c0_1] : memref<1x8x64xf32, #tpu.memory_space<vmem>>, vector<1x8x64xf32>
    %1 = vector.shape_cast %0 : vector<1x8x64xf32> to vector<8x64xf32>
    %c0_2 = arith.constant 0 : index
    %c0_3 = arith.constant 0 : index
    %2 = vector.load %arg2[%c0_2, %c0_3] : memref<64x256xf32, #tpu.memory_space<vmem>>, vector<64x256xf32>
    %cst = arith.constant dense<0.000000e+00> : vector<8x256xf32>
    %3 = tpu.matmul %1, %2, %cst {dimension_numbers = #tpu.dot_dimension_numbers<[1], [0], [0], [1], [0, 0, 1, 1], [], []>} : vector<8x64xf32>, vector<64x256xf32>, vector<8x256xf32> -> vector<8x256xf32>
    %c0_4 = arith.constant 0 : index
    %c0_5 = arith.constant 0 : index
    %c0_6 = arith.constant 0 : index
    %4 = vector.load %arg3[%c0_4, %c0_5, %c0_6] : memref<1x256x32xf32, #tpu.memory_space<vmem>>, vector<1x256x32xf32>
    %5 = vector.shape_cast %4 : vector<1x256x32xf32> to vector<256x32xf32>
    %cst_7 = arith.constant dense<0.000000e+00> : vector<8x32xf32>
    %6 = tpu.matmul %3, %5, %cst_7 {dimension_numbers = #tpu.dot_dimension_numbers<[1], [0], [0], [1], [0, 0, 1, 1], [], []>} : vector<8x256xf32>, vector<256x32xf32>, vector<8x32xf32> -> vector<8x32xf32>
    %7 = arith.negf %6 : vector<8x32xf32>
    %8 = math.exp %7 : vector<8x32xf32>
    %cst_8 = arith.constant 1.000000e+00 : f32
    %9 = vector.broadcast %cst_8 : f32 to vector<8x32xf32>
    %10 = arith.addf %9, %8 : vector<8x32xf32>
    %11 = arith.divf %9, %10 : vector<8x32xf32>
    %c0_9 = arith.constant 0 : index
    %c0_10 = arith.constant 0 : index
    %c0_11 = arith.constant 0 : index
    %12 = vector.load %arg4[%c0_9, %c0_10, %c0_11] : memref<1x8x32xf32, #tpu.memory_space<vmem>>, vector<1x8x32xf32>
    %13 = vector.shape_cast %12 : vector<1x8x32xf32> to vector<8x32xf32>
    %14 = vector.shape_cast %11 : vector<8x32xf32> to vector<1x8x32xf32>
    tpu.vector_store %arg4[%c0_9, %c0_10, %c0_11], %14 {strides = array<i32>} : memref<1x8x32xf32, #tpu.memory_space<vmem>>, vector<1x8x32xf32>,
    return
  }
  func.func @transform_0(%arg0: i32) -> (i32, i32, i32) {
    %c0_i32 = arith.constant 0 : i32
    %c0_i32_0 = arith.constant 0 : i32
    %c0_i32_1 = arith.constant 0 : i32
    return %arg0, %c0_i32, %c0_i32_0 : i32, i32, i32
  }
  func.func @transform_1(%arg0: i32) -> (i32, i32) {
    %c0_i32 = arith.constant 0 : i32
    %c0_i32_0 = arith.constant 0 : i32
    %c0_i32_1 = arith.constant 0 : i32
    return %c0_i32, %c0_i32_0 : i32, i32
  }
  func.func @transform_2(%arg0: i32) -> (i32, i32, i32) {
    %c0_i32 = arith.constant 0 : i32
    %c0_i32_0 = arith.constant 0 : i32
    %c0_i32_1 = arith.constant 0 : i32
    return %arg0, %c0_i32, %c0_i32_0 : i32, i32, i32
  }
  func.func @transform_3(%arg0: i32) -> (i32, i32, i32) {
    %c0_i32 = arith.constant 0 : i32
    %c0_i32_0 = arith.constant 0 : i32
    %c0_i32_1 = arith.constant 0 : i32
    return %arg0, %c0_i32, %c0_i32_0 : i32, i32, i32
  }
}

</mosaic_0001>

<llo_original>
// kernel: ntn_forward.1
$region0: #{ntn_forward.1}
  #allocation0 [shape = 'u32[]', space=smem, size = 0x4, offset = 0x4, fixed_abs, tag = 'smem constant byte address 0x4 - core index']
  #allocation1 [shape = 'u32[144,128]{1,0:T(1,128)}', space=vmem, size = 0x12000, scoped, tag = 'internal scratch']
  %s0 = inlined_call_operand.vmem [shape: f32[2,8,64], index: 0, kind: input, shape index: {}]
  %s1 = inlined_call_operand.vmem [shape: f32[64,256], index: 1, kind: input, shape index: {}]
  %s2 = inlined_call_operand.vmem [shape: f32[2,256,32], index: 2, kind: input, shape index: {}]
  %s3 = inlined_call_operand.vmem [shape: f32[2,8,32], index: 3, kind: output, shape index: {}]
  %s4 = sld [smem:[#allocation0]]
  $region45: #{ntn_forward.1} parent=0
    _
  %s6 = ssub.s32 1, %s4
  %s7 = scalar_select 0, %s6, %s4
  loop: start=0, step=1, limit=4
  $region2: #{ntn_forward.1} parent=0 // loop_pre_header
    _
  $region3: #{ntn_forward.1} parent=0 // loop_header
    %s9 = sphi 0, %s13
    %p10 = scmp.ge.s32.totalorder %s9, 4
    %s19 = sphi 0, %s21
    %s22 = sphi 0, %s19
    %s23 = sphi 0, %s22
    %s39 = sphi 0, %s23
    %s43 = sphi 0, %s43
    %s45 = sphi 0, %s43
    %s46 = sphi 0, %s45
    %s60 = sphi 0, %s46
    %s66 = sphi 0, %s68
    %s69 = sphi 0, %s66
    %s70 = sphi 0, %s69
    %s86 = sphi 0, %s70
    %s92 = sphi 0, %s94
    %s95 = sphi 0, %s92
    %s96 = sphi 0, %s95
    %s112 = sphi 0, %s96
  $region4: #{ntn_forward.1} parent=0 // loop_header_branch
    %12 = sbr.rel (%p10) target = $region8
  $region5: #{ntn_forward.1} parent=0 // loop_body
    %s14 = ssub.s32 %s9, 1
    %s15 = ssub.s32 %s9, 2
    %s16 = sadd.s32 %s9, 1
    %s17 = ssub.s32 %s9, %s16
    %p18 = scmp.eq.s32.totalorder %s17, 0
    %s20 = sadd.s32 %s19, 1
    %s21 = scalar_select %p18, %s19, %s20
    %p24 = pneg %p18
    %p25 = scmp.eq.s32.totalorder %s9, 1
    %p26 = por %p24, %p25
    %p27 = scmp.ne.s32.totalorder %s19, %s22
    %p28 = scmp.eq.s32.totalorder %s9, 0
    %p29 = por %p27, %p28
    %p30 = scmp.ne.s32.totalorder %s19, %s22
    %p31 = scmp.eq.s32.totalorder %s14, 1
    %p32 = por %p30, %p31
    %p33 = scmp.ne.s32.totalorder %s22, %s23
    %p34 = scmp.eq.s32.totalorder %s14, 0
    %p35 = por %p33, %p34
    %p36 = scmp.ne.s32.totalorder %s22, %s23
    %p37 = scmp.eq.s32.totalorder %s15, 1
    %p38 = por %p36, %p37
    %p40 = scmp.ne.s32.totalorder %s23, %s39
    %p41 = scmp.eq.s32.totalorder %s15, 0
    %p42 = por %p40, %p41
    %s44 = sadd.s32 %s43, 1
    %p47 = scmp.eq.s32.totalorder %s9, 1
    %p48 = scmp.ne.s32.totalorder %s43, %s45
    %p49 = scmp.eq.s32.totalorder %s9, 0
    %p50 = por %p48, %p49
    %p51 = scmp.ne.s32.totalorder %s43, %s45
    %p52 = scmp.eq.s32.totalorder %s14, 1
    %p53 = por %p51, %p52
    %p54 = scmp.ne.s32.totalorder %s45, %s46
    %p55 = scmp.eq.s32.totalorder %s14, 0
    %p56 = por %p54, %p55
    %p57 = scmp.ne.s32.totalorder %s45, %s46
    %p58 = scmp.eq.s32.totalorder %s15, 1
    %p59 = por %p57, %p58
    %p61 = scmp.ne.s32.totalorder %s46, %s60
    %p62 = scmp.eq.s32.totalorder %s15, 0
    %p63 = por %p61, %p62
    %s64 = ssub.s32 %s9, %s16
    %p65 = scmp.eq.s32.totalorder %s64, 0
    %s67 = sadd.s32 %s66, 1
    %s68 = scalar_select %p65, %s66, %s67
    %p71 = pneg %p65
    %p72 = scmp.eq.s32.totalorder %s9, 1
    %p73 = por %p71, %p72
    %p74 = scmp.ne.s32.totalorder %s66, %s69
    %p75 = scmp.eq.s32.totalorder %s9, 0
    %p76 = por %p74, %p75
    %p77 = scmp.ne.s32.totalorder %s66, %s69
    %p78 = scmp.eq.s32.totalorder %s14, 1
    %p79 = por %p77, %p78
    %p80 = scmp.ne.s32.totalorder %s69, %s70
    %p81 = scmp.eq.s32.totalorder %s14, 0
    %p82 = por %p80, %p81
    %p83 = scmp.ne.s32.totalorder %s69, %s70
    %p84 = scmp.eq.s32.totalorder %s15, 1
    %p85 = por %p83, %p84
    %p87 = scmp.ne.s32.totalorder %s70, %s86
    %p88 = scmp.eq.s32.totalorder %s15, 0
    %p89 = por %p87, %p88
    %s90 = ssub.s32 %s9, %s16
    %p91 = scmp.eq.s32.totalorder %s90, 0
    %s93 = sadd.s32 %s92, 1
    %s94 = scalar_select %p91, %s92, %s93
    %p97 = pneg %p91
    %p98 = scmp.eq.s32.totalorder %s9, 1
    %p99 = por %p97, %p98
    %p100 = scmp.ne.s32.totalorder %s92, %s95
    %p101 = scmp.eq.s32.totalorder %s9, 0
    %p102 = por %p100, %p101
    %p103 = scmp.ne.s32.totalorder %s92, %s95
    %p104 = scmp.eq.s32.totalorder %s14, 1
    %p105 = por %p103, %p104
    %p106 = scmp.ne.s32.totalorder %s95, %s96
    %p107 = scmp.eq.s32.totalorder %s14, 0
    %p108 = por %p106, %p107
    %p109 = scmp.ne.s32.totalorder %s95, %s96
    %p110 = scmp.eq.s32.totalorder %s15, 1
    %p111 = por %p109, %p110
    %p113 = scmp.ne.s32.totalorder %s96, %s112
    %p114 = scmp.eq.s32.totalorder %s15, 0
    %p115 = por %p113, %p114
    %p116 = scmp.le.s32.totalorder 1, %s9
    %p117 = scmp.lt.s32.totalorder %s9, 3
    %p118 = pnand %p116, %p117
    %p119 = pneg %p118
    // Predicated region
    $region9: #{ntn_forward.1} parent=5 // pred_check
      _
    $region10: #{ntn_forward.1} parent=5 // pred_check_branch
      %121 = sbr.rel (%p118) target = $region12
    $region11: #{ntn_forward.1} parent=5 // pred_region
      %s122 = ssub.s32 %s9, 1
      // Predicated region
      $region13: #{ntn_forward.1} parent=11 // pred_check
        %p123 = pneg %p56
      $region14: #{ntn_forward.1} parent=11 // pred_check_branch
        %125 = sbr.rel (%p123) target = $region16
      $region15: #{ntn_forward.1} parent=11 // pred_region
        _
      $region16: #{ntn_forward.1} parent=11 // pred_fallthru
        _
    $region12: #{ntn_forward.1} parent=5 // pred_fallthru
      _
    %p126 = scmp.lt.s32.totalorder %s9, 2
    // Predicated region
    $region17: #{ntn_forward.1} parent=5 // pred_check
      %p127 = pneg %p126
    $region18: #{ntn_forward.1} parent=5 // pred_check_branch
      %129 = sbr.rel (%p127) target = $region20
    $region19: #{ntn_forward.1} parent=5 // pred_region
      // Predicated region
      $region21: #{ntn_forward.1} parent=19 // pred_check
        %p130 = pneg %p29
      $region22: #{ntn_forward.1} parent=19 // pred_check_branch
        %132 = sbr.rel (%p130) target = $region24
      $region23: #{ntn_forward.1} parent=19 // pred_region
        %p133 = scmp.lt.s32.totalorder %s9, 1
        %s134 = scalar_select %p133, %s9, 1
        %s135 = smul.addr %s134, 8
        %s136 = scalar_lea.vmem %s0, %s135
      $region24: #{ntn_forward.1} parent=19 // pred_fallthru
        _
      // Predicated region
      $region25: #{ntn_forward.1} parent=19 // pred_check
        %p137 = pneg %p76
      $region26: #{ntn_forward.1} parent=19 // pred_check_branch
        %139 = sbr.rel (%p137) target = $region28
      $region27: #{ntn_forward.1} parent=19 // pred_region
        %p140 = scmp.lt.s32.totalorder %s9, 1
        %s141 = scalar_select %p140, %s9, 1
        %s142 = smul.addr %s141, 32
        %s143 = smul.addr %s142, 8
        %s144 = scalar_lea.vmem %s2, %s143
      $region28: #{ntn_forward.1} parent=19 // pred_fallthru
        _
    $region20: #{ntn_forward.1} parent=5 // pred_fallthru
      _
    %p145 = scmp.le.s32.totalorder 1, %s9
    %p146 = scmp.lt.s32.totalorder %s9, 3
    %p147 = pnand %p145, %p146
    %p148 = pneg %p147
    // Predicated region
    $region29: #{ntn_forward.1} parent=5 // pred_check
      _
    $region30: #{ntn_forward.1} parent=5 // pred_check_branch
      %150 = sbr.rel (%p147) target = $region32
    $region31: #{ntn_forward.1} parent=5 // pred_region
      %s151 = ssub.s32 %s9, 1
      %p152 = scmp.lt.s32.totalorder %s14, 1
      %s153 = scalar_select %p152, %s14, 1
      %s154 = smul.addr %s153, 8
      %s155 = scalar_lea.vmem %s0, %s154
      %p156 = pneg %p35
      %p157 = pneg %p32
      %p158 = pneg %p56
      %p159 = pneg %p53
      %p160 = scmp.lt.s32.totalorder %s14, 1
      %s161 = scalar_select %p160, %s14, 1
      %s162 = smul.addr %s161, 32
      %s163 = smul.addr %s162, 8
      %s164 = scalar_lea.vmem %s2, %s163
      %p165 = pneg %p82
      %p166 = pneg %p79
      %p167 = pneg %p108
      %p168 = pneg %p105
      %p169 = scmp.lt.s32.totalorder %s14, 1
      %s170 = scalar_select %p169, %s14, 1
      %s171 = smul.addr %s170, 8
      %s172 = scalar_lea.vmem %s3, %s171
      %p173 = scmp.lt.s32.totalorder %s14, 1
      %s174 = scalar_select %p173, %s14, 1
      %s175 = smul.addr %s174, 8
      %s176 = scalar_lea.vmem %s0, %s175
      %p177 = scmp.lt.s32.totalorder %s14, 1
      %s178 = scalar_select %p177, %s14, 1
      %s179 = smul.addr %s178, 32
      %s180 = smul.addr %s179, 8
      %s181 = scalar_lea.vmem %s2, %s180
      %p182 = scmp.lt.s32.totalorder %s14, 1
      %s183 = scalar_select %p182, %s14, 1
      %s184 = smul.addr %s183, 8
      %s185 = scalar_lea.vmem %s3, %s184
      %v186 = vld [vmem:[%s176] sm:$0xff]
      %v187 = vld [vmem:[%s1] sm:$0xff]
      %v188 = vld [vmem:[%s1 + $0x8] sm:$0xff]
      %v189 = vld [vmem:[%s1 + $0x10] sm:$0xff]
      %v190 = vld [vmem:[%s1 + $0x18] sm:$0xff]
      %v191 = vld [vmem:[%s1 + $0x20] sm:$0xff]
      %v192 = vld [vmem:[%s1 + $0x28] sm:$0xff]
      %v193 = vld [vmem:[%s1 + $0x30] sm:$0xff]
      %v194 = vld [vmem:[%s1 + $0x38] sm:$0xff]
      %v195 = vld [vmem:[%s1 + $0x40] sm:$0xff]
      %v196 = vld [vmem:[%s1 + $0x48] sm:$0xff]
      %v197 = vld [vmem:[%s1 + $0x50] sm:$0xff]
      %v198 = vld [vmem:[%s1 + $0x58] sm:$0xff]
      %v199 = vld [vmem:[%s1 + $0x60] sm:$0xff]
      %v200 = vld [vmem:[%s1 + $0x68] sm:$0xff]
      %v201 = vld [vmem:[%s1 + $0x70] sm:$0xff]
      %v202 = vld [vmem:[%s1 + $0x78] sm:$0xff]
      %vm203 = vcmask 523264
      %v205 = vsel %vm203, %v186, 0
      %207 = vmatprep.subr.mxu0 %v188
      %208 = vmatpush1.msra.mxu0 %v187
      %209 = vmatprep.subr.mxu0 %v190
      %210 = vmatpush1.msra.mxu0 %v189
      %211 = vmatprep.subr.mxu0 %v192
      %212 = vmatpush1.msra.mxu0 %v191
      %213 = vmatprep.subr.mxu0 %v194
      %214 = vmatpush1.msra.mxu0 %v193
      %215 = vmatprep.subr.mxu0 %v196
      %216 = vmatpush1.msra.mxu0 %v195
      %217 = vmatprep.subr.mxu0 %v198
      %218 = vmatpush1.msra.mxu0 %v197
      %219 = vmatprep.subr.mxu0 %v200
      %220 = vmatpush1.msra.mxu0 %v199
      %221 = vmatprep.subr.mxu0 %v202
      %222 = vmatpush1.msra.mxu0 %v201
      %223 = vmatprep.subr.mxu0 0.0
      %224 = vmatpush1.msra.mxu0 0.0
      %225 = vmatprep.subr.mxu0 0.0
      %226 = vmatpush1.msra.mxu0 0.0
      %227 = vmatprep.subr.mxu0 0.0
      %228 = vmatpush1.msra.mxu0 0.0
      %229 = vmatprep.subr.mxu0 0.0
      %230 = vmatpush1.msra.mxu0 0.0
      %231 = vmatprep.subr.mxu0 0.0
      %232 = vmatpush1.msra.mxu0 0.0
      %233 = vmatprep.subr.mxu0 0.0
      %234 = vmatpush1.msra.mxu0 0.0
      %235 = vmatprep.subr.mxu0 0.0
      %236 = vmatpush1.msra.mxu0 0.0
      %237 = vmatprep.subr.mxu0 0.0
      %238 = vmatpush1.msra.mxu0 0.0
      %239 = vmatprep.subr.mxu0 0.0
      %240 = vmatpush1.msra.mxu0 0.0
      %241 = vmatprep.subr.mxu0 0.0
      %242 = vmatpush1.msra.mxu0 0.0
      %243 = vmatprep.subr.mxu0 0.0
      %244 = vmatpush1.msra.mxu0 0.0
      %245 = vmatprep.subr.mxu0 0.0
      %246 = vmatpush1.msra.mxu0 0.0
      %247 = vmatprep.subr.mxu0 0.0
      %248 = vmatpush1.msra.mxu0 0.0
      %249 = vmatprep.subr.mxu0 0.0
      %250 = vmatpush1.msra.mxu0 0.0
      %251 = vmatprep.subr.mxu0 0.0
      %252 = vmatpush1.msra.mxu0 0.0
      %253 = vmatprep.subr.mxu0 0.0
      %254 = vmatpush1.msra.mxu0 0.0
      %255 = vmatprep.subr.mxu0 0.0
      %256 = vmatpush1.msra.mxu0 0.0
      %257 = vmatprep.subr.mxu0 0.0
      %258 = vmatpush1.msra.mxu0 0.0
      %259 = vmatprep.subr.mxu0 0.0
      %260 = vmatpush1.msra.mxu0 0.0
      %261 = vmatprep.subr.mxu0 0.0
      %262 = vmatpush1.msra.mxu0 0.0
      %263 = vmatprep.subr.mxu0 0.0
      %264 = vmatpush1.msra.mxu0 0.0
      %265 = vmatprep.subr.mxu0 0.0
      %266 = vmatpush1.msra.mxu0 0.0
      %267 = vmatprep.subr.mxu0 0.0
      %268 = vmatpush1.msra.mxu0 0.0
      %269 = vmatprep.subr.mxu0 0.0
      %270 = vmatpush1.msra.mxu0 0.0
      %271 = vmatprep.mubr.f32.mxu0 0.0
      %272 = vmatmul.mubr.f32.gmra.mrb[0].mxu0 %v205
      %v273 = vpop.f32.mrb[0].mxu0
      %v274 = vadd.f32 0.0, %v273
      %v275 = vpop.f32.mrb[0].mxu0
      %v276 = vadd.f32 0.0, %v275
      %277 = vdwg.mxu0
      %v278 = vld [vmem:[%s181] sm:$0xff]
      %v279 = vld [vmem:[%s181 + $0x8] sm:$0xff]
      %v280 = vld [vmem:[%s181 + $0x10] sm:$0xff]
      %v281 = vld [vmem:[%s181 + $0x18] sm:$0xff]
      %v282 = vld [vmem:[%s181 + $0x20] sm:$0xff]
      %v283 = vld [vmem:[%s181 + $0x28] sm:$0xff]
      %v284 = vld [vmem:[%s181 + $0x30] sm:$0xff]
      %v285 = vld [vmem:[%s181 + $0x38] sm:$0xff]
      %v286 = vld [vmem:[%s181 + $0x40] sm:$0xff]
      %v287 = vld [vmem:[%s181 + $0x48] sm:$0xff]
      %v288 = vld [vmem:[%s181 + $0x50] sm:$0xff]
      %v289 = vld [vmem:[%s181 + $0x58] sm:$0xff]
      %v290 = vld [vmem:[%s181 + $0x60] sm:$0xff]
      %v291 = vld [vmem:[%s181 + $0x68] sm:$0xff]
      %v292 = vld [vmem:[%s181 + $0x70] sm:$0xff]
      %v293 = vld [vmem:[%s181 + $0x78] sm:$0xff]
      %v294 = vld [vmem:[%s181 + $0x80] sm:$0xff]
      %v295 = vld [vmem:[%s181 + $0x88] sm:$0xff]
      %v296 = vld [vmem:[%s181 + $0x90] sm:$0xff]
      %v297 = vld [vmem:[%s181 + $0x98] sm:$0xff]
      %v298 = vld [vmem:[%s181 + $0xa0] sm:$0xff]
      %v299 = vld [vmem:[%s181 + $0xa8] sm:$0xff]
      %v300 = vld [vmem:[%s181 + $0xb0] sm:$0xff]
      %v301 = vld [vmem:[%s181 + $0xb8] sm:$0xff]
      %v302 = vld [vmem:[%s181 + $0xc0] sm:$0xff]
      %v303 = vld [vmem:[%s181 + $0xc8] sm:$0xff]
      %v304 = vld [vmem:[%s181 + $0xd0] sm:$0xff]
      %v305 = vld [vmem:[%s181 + $0xd8] sm:$0xff]
      %v306 = vld [vmem:[%s181 + $0xe0] sm:$0xff]
      %v307 = vld [vmem:[%s181 + $0xe8] sm:$0xff]
      %v308 = vld [vmem:[%s181 + $0xf0] sm:$0xff]
      %v309 = vld [vmem:[%s181 + $0xf8] sm:$0xff]
      %310 = vmatprep.subr.mxu0 0.0
      %311 = vmatpush1.msra.mxu0 %v278
      %312 = vmatprep.subr.mxu0 0.0
      %313 = vmatpush1.msra.mxu0 %v279
      %314 = vmatprep.subr.mxu0 0.0
      %315 = vmatpush1.msra.mxu0 %v280
      %316 = vmatprep.subr.mxu0 0.0
      %317 = vmatpush1.msra.mxu0 %v281
      %318 = vmatprep.subr.mxu0 0.0
      %319 = vmatpush1.msra.mxu0 %v282
      %320 = vmatprep.subr.mxu0 0.0
      %321 = vmatpush1.msra.mxu0 %v283
      %322 = vmatprep.subr.mxu0 0.0
      %323 = vmatpush1.msra.mxu0 %v284
      %324 = vmatprep.subr.mxu0 0.0
      %325 = vmatpush1.msra.mxu0 %v285
      %326 = vmatprep.subr.mxu0 0.0
      %327 = vmatpush1.msra.mxu0 %v286
      %328 = vmatprep.subr.mxu0 0.0
      %329 = vmatpush1.msra.mxu0 %v287
      %330 = vmatprep.subr.mxu0 0.0
      %331 = vmatpush1.msra.mxu0 %v288
      %332 = vmatprep.subr.mxu0 0.0
      %333 = vmatpush1.msra.mxu0 %v289
      %334 = vmatprep.subr.mxu0 0.0
      %335 = vmatpush1.msra.mxu0 %v290
      %336 = vmatprep.subr.mxu0 0.0
      %337 = vmatpush1.msra.mxu0 %v291
      %338 = vmatprep.subr.mxu0 0.0
      %339 = vmatpush1.msra.mxu0 %v292
      %340 = vmatprep.subr.mxu0 0.0
      %341 = vmatpush1.msra.mxu0 %v293
      %342 = vmatprep.subr.mxu0 0.0
      %343 = vmatpush1.msra.mxu0 %v294
      %344 = vmatprep.subr.mxu0 0.0
      %345 = vmatpush1.msra.mxu0 %v295
      %346 = vmatprep.subr.mxu0 0.0
      %347 = vmatpush1.msra.mxu0 %v296
      %348 = vmatprep.subr.mxu0 0.0
      %349 = vmatpush1.msra.mxu0 %v297
      %350 = vmatprep.subr.mxu0 0.0
      %351 = vmatpush1.msra.mxu0 %v298
      %352 = vmatprep.subr.mxu0 0.0
      %353 = vmatpush1.msra.mxu0 %v299
      %354 = vmatprep.subr.mxu0 0.0
      %355 = vmatpush1.msra.mxu0 %v300
      %356 = vmatprep.subr.mxu0 0.0
      %357 = vmatpush1.msra.mxu0 %v301
      %358 = vmatprep.subr.mxu0 0.0
      %359 = vmatpush1.msra.mxu0 %v302
      %360 = vmatprep.subr.mxu0 0.0
      %361 = vmatpush1.msra.mxu0 %v303
      %362 = vmatprep.subr.mxu0 0.0
      %363 = vmatpush1.msra.mxu0 %v304
      %364 = vmatprep.subr.mxu0 0.0
      %365 = vmatpush1.msra.mxu0 %v305
      %366 = vmatprep.subr.mxu0 0.0
      %367 = vmatpush1.msra.mxu0 %v306
      %368 = vmatprep.subr.mxu0 0.0
      %369 = vmatpush1.msra.mxu0 %v307
      %370 = vmatprep.subr.mxu0 0.0
      %371 = vmatpush1.msra.mxu0 %v308
      %372 = vmatprep.subr.mxu0 0.0
      %373 = vmatpush1.msra.mxu0 %v309
      %374 = vmatprep.mubr.f32.mxu0 %v276
      %375 = vmatmul.mubr.f32.gmra.mrb[0].mxu0 %v274
      %v376 = vpop.f32.mrb[0].mxu0
      %v377 = vadd.f32 0.0, %v376
      %v378 = vpop.f32.mrb[0].mxu0
      %379 = vdwg.mxu0
      %v380 = vxor.u32 %v377, 2147483648
      %v381 = vmul.f32 %v380, 1.442695
      %v382 = vpow.pop %v381
      %v383 = vadd.f32 %v382, 1.0
      %v384 = vrcp.pop %v383
      %v385 = vmul.f32 1.0, %v384
      %vm386 = vcmask 261120
      %387 = vst.msk [vmem:[%s185] sm:$0xff] %vm386, %v385
      %p388 = scmp.lt.s32.totalorder %s14, 1
      %s389 = scalar_select %p388, %s14, 1
      %s390 = smul.addr %s389, 8
      %s391 = scalar_lea.vmem %s3, %s390
      // Predicated region
      $region33: #{ntn_forward.1} parent=31 // pred_check
        %p392 = pneg %p105
      $region34: #{ntn_forward.1} parent=31 // pred_check_branch
        %394 = sbr.rel (%p392) target = $region36
      $region35: #{ntn_forward.1} parent=31 // pred_region
        _
      $region36: #{ntn_forward.1} parent=31 // pred_fallthru
        _
    $region32: #{ntn_forward.1} parent=5 // pred_fallthru
      _
    %p395 = scmp.le.s32.totalorder 2, %s9
    // Predicated region
    $region37: #{ntn_forward.1} parent=5 // pred_check
      %p396 = pneg %p395
    $region38: #{ntn_forward.1} parent=5 // pred_check_branch
      %398 = sbr.rel (%p396) target = $region40
    $region39: #{ntn_forward.1} parent=5 // pred_region
      %s399 = ssub.s32 %s9, 2
      // Predicated region
      $region41: #{ntn_forward.1} parent=39 // pred_check
        %p400 = pneg %p111
      $region42: #{ntn_forward.1} parent=39 // pred_check_branch
        %402 = sbr.rel (%p400) target = $region44
      $region43: #{ntn_forward.1} parent=39 // pred_region
        %p403 = scmp.lt.s32.totalorder %s15, 1
        %s404 = scalar_select %p403, %s15, 1
        %s405 = smul.addr %s404, 8
        %s406 = scalar_lea.vmem %s3, %s405
      $region44: #{ntn_forward.1} parent=39 // pred_fallthru
        _
    $region40: #{ntn_forward.1} parent=5 // pred_fallthru
      _
  $region6: #{ntn_forward.1} parent=0 // loop_footer
    %s13 = sadd.s32 1, %s9
  $region7: #{ntn_forward.1} parent=0 // loop_footer_branch
    %8 = sbr.rel target = $region3
  $region8: #{ntn_forward.1} parent=0 // loop_exit
    _

</llo_original>
